<compile_context>
chip_gen: v6e
topology: v6e:2x2x1
jax: 0.10.0
libtpu: 0.0.40
codegen_flags: <defaults>
</compile_context>

<pallas_src>
import functools
import math

import numpy as np
import jax
import jax.numpy as jnp
from jax.experimental import pallas as pl
from jax.experimental.pallas import tpu as pltpu


def _cdiv(a, b):
    return -(-a // b)


def _hetero_l2_kernel(f1_ref, f2_ref, out_ref, acc_ref, *, margin, group,
                      groups_per_tile, g_pad, chunk_rows, n_chunks, tile_rows,
                      n_rows, label_num, inv_group_sq):
    """grid = (group_tiles [parallel], row_chunks [arbitrary]).

    f1_ref / f2_ref : (chunk_rows, D) VMEM blocks, native dtype
    out_ref         : (1, 8, 128) per-group-tile partial loss (broadcast scalar)
    acc_ref         : (g_pad, D) f32 running per-group sums of (f1 - f2)
    """
    i = pl.program_id(0)          # group-tile index
    j = pl.program_id(1)          # row-chunk index within the tile

    @pl.when(j == 0)
    def _():
        acc_ref[...] = jnp.zeros_like(acc_ref)

    # f32 difference; rows past the end of the arrays (partial / clamped
    # trailing blocks contain undefined data) are zeroed before the matmul.
    d = f1_ref[...].astype(jnp.float32) - f2_ref[...].astype(jnp.float32)
    row = jax.lax.broadcasted_iota(jnp.int32, (chunk_rows, 1), 0)
    global_row = i * tile_rows + j * chunk_rows + row
    d = jnp.where(global_row < n_rows, d, 0.0)                       # (C, D)

    # 0/1 group-selection matrix: sel[g, r] = 1 iff row r of this chunk lies in
    # local group slot g.  Contracted on the MXU; removes any per-group
    # sublane-alignment requirement (no HBM-side padding, no costly reshape).
    off = j * chunk_rows + jax.lax.broadcasted_iota(
        jnp.int32, (g_pad, chunk_rows), 1)
    slot = jax.lax.broadcasted_iota(jnp.int32, (g_pad, chunk_rows), 0)
    lo = slot * group
    sel = ((off >= lo) & (off < lo + group)).astype(jnp.float32)     # (g_pad, C)

    acc_ref[...] += jnp.dot(sel, d, preferred_element_type=jnp.float32)

    @pl.when(j == n_chunks - 1)
    def _():
        s = acc_ref[...]                                             # (g_pad, D)
        sq = jnp.sum(s * s, axis=1, keepdims=True)                   # (g_pad, 1)
        gslot = jax.lax.broadcasted_iota(jnp.int32, (g_pad, 1), 0)
        gid = i * groups_per_tile + gslot
        valid = (gslot < groups_per_tile) & (gid < label_num)
        # sum_D ((s/group)**2) = (1/group^2) * sum_D s^2 ; hinge with margin.
        contrib = jnp.where(valid,
                            jnp.maximum(sq * inv_group_sq - margin, 0.0), 0.0)
        partial = jnp.sum(contrib)
        out_ref[...] = jnp.full(out_ref.shape, partial, dtype=out_ref.dtype)


def _choose_tiling(label_num, group, n_rows, D, itemsize, chunk_rows_cap=None):
    """Static (trace-time) tile geometry.

    Returns (groups_per_tile G, chunk_rows C, n_chunks, n_group_tiles) with:
      * tile_rows = G * group a multiple of the dtype sublane so the row-chunk
        block can be sublane-aligned (sublane | C, C | tile_rows);
      * the VMEM budget counting 2 inputs x 2 pipeline buffers (native dtype)
        plus ~3 chunk-sized f32 temporaries created inside the body;
      * G capped so the selection-matrix matmul stays hidden behind HBM and so
        there are >= 2 outer tiles whenever possible (v7x megacore).
    """
    sublane = {4: 8, 2: 16, 1: 32}.get(itemsize, 8)
    align = sublane // math.gcd(group, sublane)      # G must be a multiple

    per_row_bytes = D * (4 * itemsize + 12)          # 4 input bufs + f32 temps
    budget_bytes = 12 * 1024 * 1024                  # safe on v7x (64 MiB VMEM)
    c_cap = min(budget_bytes // max(per_row_bytes, 1), 4096)
    if chunk_rows_cap is not None:                   # test / tuning override
        c_cap = min(c_cap, chunk_rows_cap)
    c_cap = max(sublane, (c_cap // sublane) * sublane)

    g_cap = max(1, c_cap // group)                   # whole groups per chunk
    g_cap = min(g_cap, 128)                          # bound sel matmul / temps
    # Prefer >= 2 outer tiles so the "parallel" axis can shard across cores.
    half = align * _cdiv(_cdiv(label_num, 2), align)
    g_cap = min(g_cap, max(align, half))
    G = max(align, (g_cap // align) * align)

    tile_rows = G * group
    # Chunk rows: largest sublane-multiple divisor of tile_rows within budget.
    m = tile_rows // sublane
    best = 1
    k = 1
    while k * k <= m:
        if m % k == 0:
            for cand in (k, m // k):
                if sublane * cand <= c_cap:
                    best = max(best, cand)
        k += 1
    C = sublane * best
    n_chunks = tile_rows // C
    n_tiles = _cdiv(label_num, G)

    if C > n_rows:
        # Tiny problem: a single block equal to the full (possibly unaligned)
        # row extent is always layout-legal and fits comfortably in VMEM.
        G, C, n_chunks, n_tiles = label_num, n_rows, 1, 1

    return G, C, n_chunks, n_tiles


def hetero_loss_forward(feat1, feat2, label1, label2, *, margin=0.1,
                        label_num=None, chunk_rows_cap=None):
    """Pallas implementation of hetero_loss.forward (dist_type='l2').

    label_num is a trace-time (static) quantity, exactly as in the PyTorch
    module where it controls the Python-level chunking loop.  Pass it
    explicitly when label1 is traced; otherwise it is derived on the host.
    """
    del label2  # unused by the reference forward
    if label_num is None:
        label_num = int(np.unique(np.asarray(jax.device_get(label1))).shape[0])

    N, D = feat1.shape
    assert feat2.shape == (N, D)
    assert N % label_num == 0, "equal-size contiguous groups assumed"
    # TODO(synk): torch.chunk allows a ragged final chunk when N % label_num != 0;
    # only the equal-size case is handled here (as before).
    group = N // label_num
    itemsize = jnp.dtype(feat1.dtype).itemsize

    G, C, n_chunks, n_tiles = _choose_tiling(
        label_num, group, N, D, itemsize, chunk_rows_cap)
    tile_rows = G * group
    g_pad = _cdiv(G, 8) * 8

    # Row-block index for grid point (i, j).  If the trailing group tile would
    # request a block that lies wholly past the end of the arrays, clamp it to
    # the last in-range block (its rows are masked in-kernel anyway).
    max_blk = _cdiv(N, C) - 1
    if n_tiles * n_chunks - 1 > max_blk:
        def row_block(i, j):
            return (jnp.minimum(i * n_chunks + j, max_blk), 0)
    else:
        def row_block(i, j):
            return (i * n_chunks + j, 0)

    kernel = pl.pallas_call(
        functools.partial(
            _hetero_l2_kernel,
            margin=float(margin),
            group=group,
            groups_per_tile=G,
            g_pad=g_pad,
            chunk_rows=C,
            n_chunks=n_chunks,
            tile_rows=tile_rows,
            n_rows=N,
            label_num=label_num,
            inv_group_sq=1.0 / float(group * group),
        ),
        out_shape=jax.ShapeDtypeStruct((n_tiles, 8, 128), jnp.float32),
        grid=(n_tiles, n_chunks),
        in_specs=[
            pl.BlockSpec((C, D), row_block),
            pl.BlockSpec((C, D), row_block),
        ],
        out_specs=pl.BlockSpec((1, 8, 128), lambda i, j: (i, 0, 0)),
        scratch_shapes=[pltpu.VMEM((g_pad, D), jnp.float32)],
        compiler_params=pltpu.CompilerParams(
            dimension_semantics=("parallel", "arbitrary"),
            vmem_limit_bytes=32 * 1024 * 1024,
        ),
        cost_estimate=pl.CostEstimate(
            flops=int(2 * n_tiles * n_chunks * g_pad * C * D + 4 * N * D),
            transcendentals=0,
            bytes_accessed=int(2 * N * D * itemsize + n_tiles * 8 * 128 * 4),
        ),
    )

    partials = kernel(feat1, feat2)        # (n_tiles, 8, 128), scalar per tile
    loss = jnp.sum(partials[:, 0, 0])
    return loss, 0.0


def _reference(feat1, feat2, label_num, margin):
    f1 = np.asarray(feat1, np.float64)
    f2 = np.asarray(feat2, np.float64)
    chunks1 = np.split(f1, label_num, axis=0)
    chunks2 = np.split(f2, label_num, axis=0)
    total = 0.0
    for c1, c2 in zip(chunks1, chunks2):
        m1 = c1.mean(axis=0)
        m2 = c2.mean(axis=0)
        total += max(0.0, float(np.sum((m1 - m2) ** 2)) - margin)
    return total


if __name__ == "__main__":
    key = jax.random.PRNGKey(0)
    keys = jax.random.split(key, 6)

    # Case 1: sublane-aligned groups, lane-aligned feature dim (2 parallel tiles).
    label_num, per_label, D = 4, 8, 128
    N = label_num * per_label
    f1 = jax.random.normal(keys[0], (N, D), dtype=jnp.float32)
    f2 = jax.random.normal(keys[1], (N, D), dtype=jnp.float32)
    lab = jnp.repeat(jnp.arange(label_num, dtype=jnp.int32), per_label)
    loss, zero = hetero_loss_forward(f1, f2, lab, lab, margin=0.1)
    loss = jax.block_until_ready(loss)
    np.testing.assert_allclose(float(loss), _reference(f1, f2, label_num, 0.1),
                               rtol=1e-4, atol=1e-4)

    # Case 2: group size (6) not a multiple of 8 -> in-kernel segment-sum, no
    # wrapper-side padding copy.
    label_num2, per_label2, D2 = 3, 6, 128
    N2 = label_num2 * per_label2
    f1b = jax.random.normal(keys[2], (N2, D2), dtype=jnp.float32)
    f2b = jax.random.normal(keys[3], (N2, D2), dtype=jnp.float32)
    lab2 = jnp.repeat(jnp.arange(label_num2, dtype=jnp.int32), per_label2)
    loss2, _ = hetero_loss_forward(f1b, f2b, lab2, lab2, margin=0.1)
    loss2 = jax.block_until_ready(loss2)
    np.testing.assert_allclose(float(loss2),
                               _reference(f1b, f2b, label_num2, 0.1),
                               rtol=1e-4, atol=1e-4)

    # Case 3: force the multi-chunk accumulator path + ragged trailing tile
    # (exercises the inner "arbitrary" axis, row masking, and block clamping).
    label_num3, per_label3, D3 = 5, 6, 128
    N3 = label_num3 * per_label3
    f1c = jax.random.normal(keys[4], (N3, D3), dtype=jnp.float32)
    f2c = jax.random.normal(keys[5], (N3, D3), dtype=jnp.float32)
    lab3 = jnp.repeat(jnp.arange(label_num3, dtype=jnp.int32), per_label3)
    loss3, _ = hetero_loss_forward(f1c, f2c, lab3, lab3, margin=0.1,
                                   chunk_rows_cap=8)
    loss3 = jax.block_until_ready(loss3)
    np.testing.assert_allclose(float(loss3),
                               _reference(f1c, f2c, label_num3, 0.1),
                               rtol=1e-4, atol=1e-4)

    print("KERNEL_OK")
</pallas_src>

<mosaic_0001>
module attributes {stable_mosaic.version = 11 : i64} {
  func.func @_hetero_l2_kernel(%arg0: i32, %arg1: i32, %arg2: memref<16x128xf32, #tpu.memory_space<vmem>>, %arg3: memref<16x128xf32, #tpu.memory_space<vmem>>, %arg4: memref<1x8x128xf32, #tpu.memory_space<vmem>>, %arg5: memref<8x128xf32, #tpu.memory_space<vmem>>) attributes {dimension_semantics = [#tpu.dimension_semantics<parallel>, #tpu.dimension_semantics<arbitrary>], iteration_bounds = array<i64: 2, 1>, scalar_prefetch = 0 : i64, scratch_operands = 1 : i64, tpu.core_type = #tpu.core_type<tc>, window_params = [{transform_indices = @transform_0, window_bounds = array<i64: 16, 128>}, {transform_indices = @transform_1, window_bounds = array<i64: 16, 128>}, {transform_indices = @transform_2, window_bounds = array<i64: 1, 8, 128>}]} {
    %c0_i32 = arith.constant 0 : i32
    %0 = arith.cmpi eq, %arg1, %c0_i32 : i32
    %1 = arith.extui %0 : i1 to i32
    %c0_i32_0 = arith.constant 0 : i32
    %2 = arith.cmpi ne, %1, %c0_i32_0 : i32
    scf.if %2 {
      %cst_14 = arith.constant 0.000000e+00 : f32
      %39 = vector.broadcast %cst_14 : f32 to vector<8x128xf32>
      %c0_15 = arith.constant 0 : index
      %c0_16 = arith.constant 0 : index
      %40 = vector.load %arg5[%c0_15, %c0_16] : memref<8x128xf32, #tpu.memory_space<vmem>>, vector<8x128xf32>
      tpu.vector_store %arg5[%c0_15, %c0_16], %39 {strides = array<i32>} : memref<8x128xf32, #tpu.memory_space<vmem>>, vector<8x128xf32>,
    } else {
    }
    %c0 = arith.constant 0 : index
    %c0_1 = arith.constant 0 : index
    %3 = vector.load %arg2[%c0, %c0_1] : memref<16x128xf32, #tpu.memory_space<vmem>>, vector<16x128xf32>
    %c0_2 = arith.constant 0 : index
    %c0_3 = arith.constant 0 : index
    %4 = vector.load %arg3[%c0_2, %c0_3] : memref<16x128xf32, #tpu.memory_space<vmem>>, vector<16x128xf32>
    %5 = arith.subf %3, %4 : vector<16x128xf32>
    %6 = tpu.iota {dimensions = array<i32: 0>} : vector<16x1xi32>
    %c16_i32 = arith.constant 16 : i32
    %7 = arith.muli %arg0, %c16_i32 : i32
    %c16_i32_4 = arith.constant 16 : i32
    %8 = arith.muli %arg1, %c16_i32_4 : i32
    %9 = arith.addi %7, %8 : i32
    %10 = vector.broadcast %9 : i32 to vector<16x1xi32>
    %11 = arith.addi %10, %6 : vector<16x1xi32>
    %c32_i32 = arith.constant 32 : i32
    %12 = vector.broadcast %c32_i32 : i32 to vector<16x1xi32>
    %13 = arith.cmpi slt, %11, %12 : vector<16x1xi32>
    %cst = arith.constant 0.000000e+00 : f32
    %14 = vector.shape_cast %13 : vector<16x1xi1> to vector<16x1xi1>
    %15 = vector.broadcast %14 : vector<16x1xi1> to vector<16x128xi1>
    %16 = vector.broadcast %cst : f32 to vector<16x128xf32>
    %17 = arith.select %15, %5, %16 : vector<16x128xi1>, vector<16x128xf32>
    %c16_i32_5 = arith.constant 16 : i32
    %18 = arith.muli %arg1, %c16_i32_5 : i32
    %19 = tpu.iota {dimensions = array<i32: 1>} : vector<8x16xi32>
    %20 = vector.broadcast %18 : i32 to vector<8x16xi32>
    %21 = arith.addi %20, %19 : vector<8x16xi32>
    %22 = tpu.iota {dimensions = array<i32: 0>} : vector<8x16xi32>
    %c8_i32 = arith.constant 8 : i32
    %23 = vector.broadcast %c8_i32 : i32 to vector<8x16xi32>
    %24 = arith.muli %22, %23 : vector<8x16xi32>
    %25 = arith.cmpi sge, %21, %24 : vector<8x16xi32>
    %c8_i32_6 = arith.constant 8 : i32
    %26 = vector.broadcast %c8_i32_6 : i32 to vector<8x16xi32>
    %27 = arith.addi %24, %26 : vector<8x16xi32>
    %28 = arith.cmpi slt, %21, %27 : vector<8x16xi32>
    %29 = arith.andi %25, %28 : vector<8x16xi1>
    %30 = arith.extui %29 : vector<8x16xi1> to vector<8x16xi32>
    %31 = arith.sitofp %30 : vector<8x16xi32> to vector<8x16xf32>
    %c0_7 = arith.constant 0 : index
    %c0_8 = arith.constant 0 : index
    %32 = vector.load %arg5[%c0_7, %c0_8] : memref<8x128xf32, #tpu.memory_space<vmem>>, vector<8x128xf32>
    %cst_9 = arith.constant dense<0.000000e+00> : vector<8x128xf32>
    %33 = tpu.matmul %31, %17, %cst_9 {dimension_numbers = #tpu.dot_dimension_numbers<[1], [0], [0], [1], [0, 0, 1, 1], [], []>} : vector<8x16xf32>, vector<16x128xf32>, vector<8x128xf32> -> vector<8x128xf32>
    %34 = arith.addf %32, %33 : vector<8x128xf32>
    %c0_10 = arith.constant 0 : index
    %c0_11 = arith.constant 0 : index
    %35 = vector.load %arg5[%c0_10, %c0_11] : memref<8x128xf32, #tpu.memory_space<vmem>>, vector<8x128xf32>
    tpu.vector_store %arg5[%c0_10, %c0_11], %34 {strides = array<i32>} : memref<8x128xf32, #tpu.memory_space<vmem>>, vector<8x128xf32>,
    %c0_i32_12 = arith.constant 0 : i32
    %36 = arith.cmpi eq, %arg1, %c0_i32_12 : i32
    %37 = arith.extui %36 : i1 to i32
    %c0_i32_13 = arith.constant 0 : i32
    %38 = arith.cmpi ne, %37, %c0_i32_13 : i32
    scf.if %38 {
      %c0_14 = arith.constant 0 : index
      %c0_15 = arith.constant 0 : index
      %39 = vector.load %arg5[%c0_14, %c0_15] : memref<8x128xf32, #tpu.memory_space<vmem>>, vector<8x128xf32>
      %40 = arith.mulf %39, %39 : vector<8x128xf32>
      %cst_16 = arith.constant dense<0.000000e+00> : vector<8xf32>
      %41 = vector.multi_reduction <add>, %40, %cst_16 [1] : vector<8x128xf32> to vector<8xf32>
      %42 = vector.shape_cast %41 : vector<8xf32> to vector<8x1xf32>
      %43 = tpu.iota {dimensions = array<i32: 0>} : vector<8x1xi32>
      %c2_i32 = arith.constant 2 : i32
      %44 = arith.muli %arg0, %c2_i32 : i32
      %45 = vector.broadcast %44 : i32 to vector<8x1xi32>
      %46 = arith.addi %45, %43 : vector<8x1xi32>
      %c2_i32_17 = arith.constant 2 : i32
      %47 = vector.broadcast %c2_i32_17 : i32 to vector<8x1xi32>
      %48 = arith.cmpi slt, %43, %47 : vector<8x1xi32>
      %c4_i32 = arith.constant 4 : i32
      %49 = vector.broadcast %c4_i32 : i32 to vector<8x1xi32>
      %50 = arith.cmpi slt, %46, %49 : vector<8x1xi32>
      %51 = arith.andi %48, %50 : vector<8x1xi1>
      %cst_18 = arith.constant 1.562500e-02 : f32
      %52 = vector.broadcast %cst_18 : f32 to vector<8x1xf32>
      %53 = arith.mulf %42, %52 : vector<8x1xf32>
      %cst_19 = arith.constant 1.000000e-01 : f32
      %54 = vector.broadcast %cst_19 : f32 to vector<8x1xf32>
      %55 = arith.subf %53, %54 : vector<8x1xf32>
      %cst_20 = arith.constant 0.000000e+00 : f32
      %56 = vector.broadcast %cst_20 : f32 to vector<8x1xf32>
      %57 = arith.maximumf %55, %56 : vector<8x1xf32>
      %cst_21 = arith.constant 0.000000e+00 : f32
      %58 = vector.broadcast %cst_21 : f32 to vector<8x1xf32>
      %59 = arith.select %51, %57, %58 : vector<8x1xi1>, vector<8x1xf32>
      %60 = vector.shape_cast %59 : vector<8x1xf32> to vector<1x8x1xf32>
      %cst_22 = arith.constant dense<0.000000e+00> : vector<1xf32>
      %61 = vector.multi_reduction <add>, %60, %cst_22 [1, 2] : vector<1x8x1xf32> to vector<1xf32>
      %62 = vector.shape_cast %61 : vector<1xf32> to vector<1x1x1xf32>
      %63 = vector.extract %62[0, 0, 0] : f32 from vector<1x1x1xf32>
      %64 = vector.broadcast %63 : f32 to vector<1x8x128xf32>
      %c0_23 = arith.constant 0 : index
      %c0_24 = arith.constant 0 : index
      %c0_25 = arith.constant 0 : index
      %65 = vector.load %arg4[%c0_23, %c0_24, %c0_25] : memref<1x8x128xf32, #tpu.memory_space<vmem>>, vector<1x8x128xf32>
      tpu.vector_store %arg4[%c0_23, %c0_24, %c0_25], %64 {strides = array<i32>} : memref<1x8x128xf32, #tpu.memory_space<vmem>>, vector<1x8x128xf32>,
    } else {
    }
    return
  }
  func.func @transform_0(%arg0: i32, %arg1: i32) -> (i32, i32) {
    %c1_i32 = arith.constant 1 : i32
    %0 = arith.muli %arg0, %c1_i32 : i32
    %1 = arith.addi %0, %arg1 : i32
    %c0_i32 = arith.constant 0 : i32
    %c0_i32_0 = arith.constant 0 : i32
    return %1, %c0_i32 : i32, i32
  }
  func.func @transform_1(%arg0: i32, %arg1: i32) -> (i32, i32) {
    %c1_i32 = arith.constant 1 : i32
    %0 = arith.muli %arg0, %c1_i32 : i32
    %1 = arith.addi %0, %arg1 : i32
    %c0_i32 = arith.constant 0 : i32
    %c0_i32_0 = arith.constant 0 : i32
    return %1, %c0_i32 : i32, i32
  }
  func.func @transform_2(%arg0: i32, %arg1: i32) -> (i32, i32, i32) {
    %c0_i32 = arith.constant 0 : i32
    %c0_i32_0 = arith.constant 0 : i32
    %c0_i32_1 = arith.constant 0 : i32
    return %arg0, %c0_i32, %c0_i32_0 : i32, i32, i32
  }
}

</mosaic_0001>

<llo_original>
// kernel: tpu_custom_call.1
$region0: #{tpu_custom_call.1}
  #allocation0 [shape = 'u32[]', space=smem, size = 0x4, offset = 0x4, fixed_abs, tag = 'smem constant byte address 0x4 - core index']
  #allocation1 [shape = 'u32[144,128]{1,0:T(1,128)}', space=vmem, size = 0x12000, scoped, tag = 'internal scratch']
  #allocation2 [shape = 'f32[8,128]{1,0:T(8,128)}', space=vmem, size = 0x1000, scoped, tag = 'scratch operand']
  %s0 = inlined_call_operand.hbm [shape: f32[32,128], index: 0, kind: input, shape index: {}]
  %s1 = inlined_call_operand.hbm [shape: f32[32,128], index: 1, kind: input, shape index: {}]
  %s2 = inlined_call_operand.hbm [shape: f32[2,8,128], index: 2, kind: output, shape index: {}]
  %s3 = sld [smem:[#allocation0]]
  $region57: #{tpu_custom_call.1} parent=0
    _
  %s5 = ssub.s32 1, %s3
  %s6 = scalar_select 0, %s5, %s3
  $region1: #{tpu_custom_call.1} parent=0
    #allocation3 [shape = 'u8[16384]{0}', space=vmem, size = 0x4000, scoped, tag = 'input window, operand 0']
    #allocation4 [shape = 's32[2]{0}', space=sflag, size = 0x8, scoped, tag = 'scoped memory for tpu_custom_call.1']
    #allocation5 [shape = 's32[2]{0}', space=sflag, size = 0x8, scoped, tag = 'scoped memory for tpu_custom_call.1']
    #allocation6 [shape = 'u8[16384]{0}', space=vmem, size = 0x4000, scoped, tag = 'input window, operand 1']
    #allocation7 [shape = 's32[2]{0}', space=sflag, size = 0x8, scoped, tag = 'scoped memory for tpu_custom_call.1']
    #allocation8 [shape = 'u8[8192]{0}', space=vmem, size = 0x2000, scoped, tag = 'output window, operand 0']
    %7 = vsyncpa [#allocation4], 0
    %s8 = scalar_lea.sflag [#allocation4], 1
    %9 = vsyncpa %s8, 0
    %10 = vsyncpa [#allocation7], 0
    %s11 = scalar_lea.sflag [#allocation7], 1
    %12 = vsyncpa %s11, 0
    %13 = vsyncpa [#allocation5], 0
    %s14 = scalar_lea.sflag [#allocation5], 1
    %15 = vsyncpa %s14, 0
    loop: start=0, step=1, limit=4
    $region2: #{tpu_custom_call.1} parent=1 // loop_pre_header
      _
    $region3: #{tpu_custom_call.1} parent=1 // loop_header
      %s17 = sphi 0, %s21
      %p18 = scmp.ge.s32.totalorder %s17, 4
      %s24 = sphi 0, %s36
      %s25 = sphi 0, %s32
      %s26 = sphi 0, %s24
      %s27 = sphi 0, %s25
      %s28 = sphi 0, %s26
      %s29 = sphi 0, %s27
      %s41 = sphi 0, %s43
      %s44 = sphi 0, %s41
      %s45 = sphi 0, %s44
      %s61 = sphi 0, %s45
      %s69 = sphi 0, %s71
      %s72 = sphi 0, %s69
      %s73 = sphi 0, %s72
      %s89 = sphi 0, %s73
      %s95 = sphi 0, %s97
      %s98 = sphi 0, %s95
      %s99 = sphi 0, %s98
      %s115 = sphi 0, %s99
    $region4: #{tpu_custom_call.1} parent=1 // loop_header_branch
      %20 = sbr.rel (%p18) target = $region8
    $region5: #{tpu_custom_call.1} parent=1 // loop_body
      %s22 = ssub.s32 %s17, 1
      %s23 = ssub.s32 %s17, 2
      %s30 = sadd.s32 1, %s25
      %p31 = scmp.ge.s32.totalorder %s30, 1
      %s32 = scalar_select %p31, 0, %s30
      %s33 = sadd.s32 1, %s24
      %s34 = scalar_select %p31, %s33, %s24
      %p35 = scmp.ge.s32.totalorder %s34, 2
      %s36 = scalar_select %p35, 0, %s34
      %s37 = sadd.s32 %s24, %s25
      %s38 = sadd.s32 %s36, %s32
      %s39 = ssub.s32 %s37, %s38
      %p40 = scmp.eq.s32.totalorder %s39, 0
      %s42 = sadd.s32 %s41, 1
      %s43 = scalar_select %p40, %s41, %s42
      %p46 = pneg %p40
      %p47 = scmp.eq.s32.totalorder %s17, 1
      %p48 = por %p46, %p47
      %p49 = scmp.ne.s32.totalorder %s41, %s44
      %p50 = scmp.eq.s32.totalorder %s17, 0
      %p51 = por %p49, %p50
      %p52 = scmp.ne.s32.totalorder %s41, %s44
      %p53 = scmp.eq.s32.totalorder %s22, 1
      %p54 = por %p52, %p53
      %p55 = scmp.ne.s32.totalorder %s44, %s45
      %p56 = scmp.eq.s32.totalorder %s22, 0
      %p57 = por %p55, %p56
      %p58 = scmp.ne.s32.totalorder %s44, %s45
      %p59 = scmp.eq.s32.totalorder %s23, 1
      %p60 = por %p58, %p59
      %p62 = scmp.ne.s32.totalorder %s45, %s61
      %p63 = scmp.eq.s32.totalorder %s23, 0
      %p64 = por %p62, %p63
      %s65 = sadd.s32 %s24, %s25
      %s66 = sadd.s32 %s36, %s32
      %s67 = ssub.s32 %s65, %s66
      %p68 = scmp.eq.s32.totalorder %s67, 0
      %s70 = sadd.s32 %s69, 1
      %s71 = scalar_select %p68, %s69, %s70
      %p74 = pneg %p68
      %p75 = scmp.eq.s32.totalorder %s17, 1
      %p76 = por %p74, %p75
      %p77 = scmp.ne.s32.totalorder %s69, %s72
      %p78 = scmp.eq.s32.totalorder %s17, 0
      %p79 = por %p77, %p78
      %p80 = scmp.ne.s32.totalorder %s69, %s72
      %p81 = scmp.eq.s32.totalorder %s22, 1
      %p82 = por %p80, %p81
      %p83 = scmp.ne.s32.totalorder %s72, %s73
      %p84 = scmp.eq.s32.totalorder %s22, 0
      %p85 = por %p83, %p84
      %p86 = scmp.ne.s32.totalorder %s72, %s73
      %p87 = scmp.eq.s32.totalorder %s23, 1
      %p88 = por %p86, %p87
      %p90 = scmp.ne.s32.totalorder %s73, %s89
      %p91 = scmp.eq.s32.totalorder %s23, 0
      %p92 = por %p90, %p91
      %s93 = ssub.s32 %s24, %s36
      %p94 = scmp.eq.s32.totalorder %s93, 0
      %s96 = sadd.s32 %s95, 1
      %s97 = scalar_select %p94, %s95, %s96
      %p100 = pneg %p94
      %p101 = scmp.eq.s32.totalorder %s17, 1
      %p102 = por %p100, %p101
      %p103 = scmp.ne.s32.totalorder %s95, %s98
      %p104 = scmp.eq.s32.totalorder %s17, 0
      %p105 = por %p103, %p104
      %p106 = scmp.ne.s32.totalorder %s95, %s98
      %p107 = scmp.eq.s32.totalorder %s22, 1
      %p108 = por %p106, %p107
      %p109 = scmp.ne.s32.totalorder %s98, %s99
      %p110 = scmp.eq.s32.totalorder %s22, 0
      %p111 = por %p109, %p110
      %p112 = scmp.ne.s32.totalorder %s98, %s99
      %p113 = scmp.eq.s32.totalorder %s23, 1
      %p114 = por %p112, %p113
      %p116 = scmp.ne.s32.totalorder %s99, %s115
      %p117 = scmp.eq.s32.totalorder %s23, 0
      %p118 = por %p116, %p117
      %p119 = scmp.le.s32.totalorder 1, %s17
      %p120 = scmp.lt.s32.totalorder %s17, 3
      %p121 = pnand %p119, %p120
      %p122 = pneg %p121
      // Predicated region
      $region9: #{tpu_custom_call.1} parent=5 // pred_check
        _
      $region10: #{tpu_custom_call.1} parent=5 // pred_check_branch
        %124 = sbr.rel (%p121) target = $region12
      $region11: #{tpu_custom_call.1} parent=5 // pred_region
        %s125 = ssub.s32 %s17, 1
      $region12: #{tpu_custom_call.1} parent=5 // pred_fallthru
        _
      %p126 = scmp.lt.s32.totalorder %s17, 2
      // Predicated region
      $region13: #{tpu_custom_call.1} parent=5 // pred_check
        %p127 = pneg %p126
      $region14: #{tpu_custom_call.1} parent=5 // pred_check_branch
        %129 = sbr.rel (%p127) target = $region16
      $region15: #{tpu_custom_call.1} parent=5 // pred_region
        // Predicated region
        $region17: #{tpu_custom_call.1} parent=15 // pred_check
          %p130 = pneg %p51
        $region18: #{tpu_custom_call.1} parent=15 // pred_check_branch
          %132 = sbr.rel (%p130) target = $region20
        $region19: #{tpu_custom_call.1} parent=15 // pred_region
          %s133 = sand.u32 %s41, 1
          %s134 = scalar_lea.sflag [#allocation4], %s133
          %s135 = sand.u32 %s41, 1
          %s136 = smul.addr %s135, 16
          %s137 = scalar_lea.vmem [#allocation3], %s136
          %s138 = sadd.s32 %s24, %s25
          %s139 = smul.u32 2, %s138
          %s141 = ssub.s32 256, 256
          %142 = vsyncadd %s134, %s141
          %s143 = smul.addr %s139, 128
          %s144 = scalar_lea.hbm %s0, %s143
          %s145 = sshll.u32 %s137, 4
          %s146 = int_to_ptr.vmem [resolvable:$true] %s145
          %151 = dma.hbm_to_vmem [thread:$0]  %s144, 256, %s146, %s134, 128, 128, 8
        $region20: #{tpu_custom_call.1} parent=15 // pred_fallthru
          _
        // Predicated region
        $region21: #{tpu_custom_call.1} parent=15 // pred_check
          %p152 = pneg %p79
        $region22: #{tpu_custom_call.1} parent=15 // pred_check_branch
          %154 = sbr.rel (%p152) target = $region24
        $region23: #{tpu_custom_call.1} parent=15 // pred_region
          %s155 = sand.u32 %s69, 1
          %s156 = scalar_lea.sflag [#allocation7], %s155
          %s157 = sand.u32 %s69, 1
          %s158 = smul.addr %s157, 16
          %s159 = scalar_lea.vmem [#allocation6], %s158
          %s160 = sadd.s32 %s24, %s25
          %s161 = smul.u32 2, %s160
          %s163 = ssub.s32 256, 256
          %164 = vsyncadd %s156, %s163
          %s165 = smul.addr %s161, 128
          %s166 = scalar_lea.hbm %s1, %s165
          %s167 = sshll.u32 %s159, 4
          %s168 = int_to_ptr.vmem [resolvable:$true] %s167
          %173 = dma.hbm_to_vmem [thread:$0]  %s166, 256, %s168, %s156, 128, 128, 8
        $region24: #{tpu_custom_call.1} parent=15 // pred_fallthru
          _
      $region16: #{tpu_custom_call.1} parent=5 // pred_fallthru
        _
      %p174 = scmp.le.s32.totalorder 1, %s17
      %p175 = scmp.lt.s32.totalorder %s17, 3
      %p176 = pnand %p174, %p175
      %p177 = pneg %p176
      // Predicated region
      $region25: #{tpu_custom_call.1} parent=5 // pred_check
        _
      $region26: #{tpu_custom_call.1} parent=5 // pred_check_branch
        %179 = sbr.rel (%p176) target = $region28
      $region27: #{tpu_custom_call.1} parent=5 // pred_region
        %s180 = ssub.s32 %s17, 1
        %s181 = sand.u32 %s44, 1
        %s182 = scalar_lea.sflag [#allocation4], %s181
        %s183 = sand.u32 %s44, 1
        %s184 = smul.addr %s183, 16
        %s185 = scalar_lea.vmem [#allocation3], %s184
        // Predicated region
        $region29: #{tpu_custom_call.1} parent=27 // pred_check
          %p186 = pneg %p57
        $region30: #{tpu_custom_call.1} parent=27 // pred_check_branch
          %188 = sbr.rel (%p186) target = $region32
        $region31: #{tpu_custom_call.1} parent=27 // pred_region
          %189 = dma.done %s182, 256
        $region32: #{tpu_custom_call.1} parent=27 // pred_fallthru
          _
        %s190 = sand.u32 %s72, 1
        %s191 = scalar_lea.sflag [#allocation7], %s190
        %s192 = sand.u32 %s72, 1
        %s193 = smul.addr %s192, 16
        %s194 = scalar_lea.vmem [#allocation6], %s193
        // Predicated region
        $region33: #{tpu_custom_call.1} parent=27 // pred_check
          %p195 = pneg %p85
        $region34: #{tpu_custom_call.1} parent=27 // pred_check_branch
          %197 = sbr.rel (%p195) target = $region36
        $region35: #{tpu_custom_call.1} parent=27 // pred_region
          %198 = dma.done %s191, 256
        $region36: #{tpu_custom_call.1} parent=27 // pred_fallthru
          _
        %s199 = sand.u32 %s44, 1
        %s200 = scalar_lea.sflag [#allocation4], %s199
        %s201 = sand.u32 %s44, 1
        %s202 = smul.addr %s201, 16
        %s203 = scalar_lea.vmem [#allocation3], %s202
        %p204 = pneg %p57
        %p205 = pneg %p54
        %s206 = sand.u32 %s72, 1
        %s207 = scalar_lea.sflag [#allocation7], %s206
        %s208 = sand.u32 %s72, 1
        %s209 = smul.addr %s208, 16
        %s210 = scalar_lea.vmem [#allocation6], %s209
        %p211 = pneg %p85
        %p212 = pneg %p82
        %p213 = pneg %p111
        %p214 = pneg %p108
        %s215 = sand.u32 %s98, 1
        %s216 = scalar_lea.sflag [#allocation5], %s215
        %s217 = sand.u32 %s98, 1
        %s218 = smul.addr %s217, 8
        %s219 = scalar_lea.vmem [#allocation8], %s218
        %s220 = sadd.s32 %s26, %s27
        %s221 = smul.u32 2, %s220
        %s222 = sadd.s32 %s26, %s27
        %s223 = smul.u32 2, %s222
        %p224 = scmp.eq.s32.totalorder %s27, 0
        // Predicated region
        $region37: #{tpu_custom_call.1} parent=27 // pred_check
          %p225 = pneg %p224
        $region38: #{tpu_custom_call.1} parent=27 // pred_check_branch
          %227 = sbr.rel (%p225) target = $region40
        $region39: #{tpu_custom_call.1} parent=27 // pred_region
          %228 = vst [vmem:[#allocation2] sm:$0xff] 0.0
        $region40: #{tpu_custom_call.1} parent=27 // pred_fallthru
          _
        %v229 = vld [vmem:[%s185] sm:$0xff]
        %v230 = vld [vmem:[%s185 + $0x8] sm:$0xff]
        %v231 = vld [vmem:[%s194] sm:$0xff]
        %v232 = vld [vmem:[%s194 + $0x8] sm:$0xff]
        %v233 = vsub.f32 %v229, %v231
        %v234 = vsub.f32 %v230, %v232
        %v235 = vlaneseq
        %v236 = vshrl.u32 %v235, 7
        %v237 = vadd.s32 %v236, 8
        %s238 = smul.u32 %s26, 16
        %s239 = smul.u32 %s27, 16
        %s240 = sadd.s32 %s238, %s239
        %v241 = vstv %s240
        %v242 = vadd.s32 %v241, %v236
        %v243 = vadd.s32 %v241, %v237
        %vm244 = vcmp.lt.s32.totalorder %v242, 32
        %vm245 = vcmp.lt.s32.totalorder %v243, 32
        %v246 = vsel %vm244, 1, 0
        %v247 = vsel %vm245, 1, 0
        %vm248 = vcmp.eq.s32.totalorder %v246, 1
        %vm249 = vcmp.eq.s32.totalorder %v247, 1
        %v250 = vsel %vm248, %v233, 0.0
        %v251 = vsel %vm249, %v234, 0.0
        %v252 = vlaneseq
        %v253 = vand.u32 %v252, 127
        %v254 = vstv %s239
        %v255 = vadd.s32 %v254, %v253
        %v256 = vmul.u32 %v236, 8
        %vm257 = vcmp.ge.s32.totalorder %v255, %v256
        %v258 = vadd.s32 %v256, 8
        %vm259 = vcmp.lt.s32.totalorder %v255, %v258
        %vm260 = vmand %vm257, %vm259
        %v261 = vsel %vm260, 1, 0
        %v262 = vcvt.s32.f32 %v261
        %v263 = vld [vmem:[#allocation2] sm:$0xff]
        %vm264 = vcmask 130048
        %v266 = vsel %vm264, %v262, 0
        %268 = vmatprep.subr.mxu0 0.0
        %269 = vmatpush1.msra.mxu0 0.0
        %270 = vmatprep.subr.mxu0 0.0
        %271 = vmatpush1.msra.mxu0 0.0
        %272 = vmatprep.subr.mxu0 0.0
        %273 = vmatpush1.msra.mxu0 0.0
        %274 = vmatprep.subr.mxu0 0.0
        %275 = vmatpush1.msra.mxu0 0.0
        %276 = vmatprep.subr.mxu0 0.0
        %277 = vmatpush1.msra.mxu0 0.0
        %278 = vmatprep.subr.mxu0 0.0
        %279 = vmatpush1.msra.mxu0 0.0
        %280 = vmatprep.subr.mxu0 0.0
        %281 = vmatpush1.msra.mxu0 0.0
        %282 = vmatprep.subr.mxu0 0.0
        %283 = vmatpush1.msra.mxu0 0.0
        %284 = vmatprep.subr.mxu0 0.0
        %285 = vmatpush1.msra.mxu0 0.0
        %286 = vmatprep.subr.mxu0 0.0
        %287 = vmatpush1.msra.mxu0 0.0
        %288 = vmatprep.subr.mxu0 0.0
        %289 = vmatpush1.msra.mxu0 0.0
        %290 = vmatprep.subr.mxu0 0.0
        %291 = vmatpush1.msra.mxu0 0.0
        %292 = vmatprep.subr.mxu0 0.0
        %293 = vmatpush1.msra.mxu0 0.0
        %294 = vmatprep.subr.mxu0 0.0
        %295 = vmatpush1.msra.mxu0 0.0
        %296 = vmatprep.subr.mxu0 0.0
        %297 = vmatpush1.msra.mxu0 %v251
        %298 = vmatprep.subr.mxu0 0.0
        %299 = vmatpush1.msra.mxu0 %v250
        %300 = vmatprep.subr.mxu0 0.0
        %301 = vmatpush2.msra.mxu0 0.0
        %302 = vmatprep.subr.mxu0 0.0
        %303 = vmatpush2.msra.mxu0 0.0
        %304 = vmatprep.subr.mxu0 0.0
        %305 = vmatpush2.msra.mxu0 0.0
        %306 = vmatprep.subr.mxu0 0.0
        %307 = vmatpush2.msra.mxu0 0.0
        %308 = vmatprep.subr.mxu0 0.0
        %309 = vmatpush2.msra.mxu0 0.0
        %310 = vmatprep.subr.mxu0 0.0
        %311 = vmatpush2.msra.mxu0 0.0
        %312 = vmatprep.subr.mxu0 0.0
        %313 = vmatpush2.msra.mxu0 0.0
        %314 = vmatprep.subr.mxu0 0.0
        %315 = vmatpush2.msra.mxu0 0.0
        %316 = vmatprep.subr.mxu0 0.0
        %317 = vmatpush2.msra.mxu0 0.0
        %318 = vmatprep.subr.mxu0 0.0
        %319 = vmatpush2.msra.mxu0 0.0
        %320 = vmatprep.subr.mxu0 0.0
        %321 = vmatpush2.msra.mxu0 0.0
        %322 = vmatprep.subr.mxu0 0.0
        %323 = vmatpush2.msra.mxu0 0.0
        %324 = vmatprep.subr.mxu0 0.0
        %325 = vmatpush2.msra.mxu0 0.0
        %326 = vmatprep.subr.mxu0 0.0
        %327 = vmatpush2.msra.mxu0 0.0
        %328 = vmatprep.subr.mxu0 0.0
        %329 = vmatpush2.msra.mxu0 0.0
        %330 = vmatprep.subr.mxu0 0.0
        %331 = vmatpush2.msra.mxu0 0.0
        %332 = vmatprep.mubr.f32.mxu0 0.0
        %333 = vmatmul.mubr.f32.gmra.mxu0 %v266
        %v334 = vpop.f32.mrf.mxu0
        %v335 = vadd.f32 0.0, %v334
        %v336 = vpop.f32.mrf.mxu0
        %337 = vdwg.mxu0
        %v338 = vadd.f32 %v263, %v335
        %339 = vst [vmem:[#allocation2] sm:$0xff] %v338
        // Predicated region
        $region41: #{tpu_custom_call.1} parent=27 // pred_check
          %p340 = pneg %p224
        $region42: #{tpu_custom_call.1} parent=27 // pred_check_branch
          %342 = sbr.rel (%p340) target = $region44
        $region43: #{tpu_custom_call.1} parent=27 // pred_region
          %v343 = vld [vmem:[#allocation2] sm:$0xff]
          %v344 = vmul.f32 %v343, %v343
          %345 = vadd.xlane.f32.xlu0 %v344
          %v346 = vpop.xlane.xlu0 %345
          %s347 = smul.u32 %s26, 2
          %v348 = vstv %s347
          %v349 = vadd.s32 %v348, %v236
          %vm350 = vcmp.lt.s32.totalorder %v236, 2
          %vm351 = vcmp.lt.s32.totalorder %v349, 4
          %vm352 = vmand %vm350, %vm351
          %v353 = vmul.f32 %v346, 0.015625
          %v354 = vsub.f32 %v353, 0.1
          %v355 = vmax.f32 %v354, 0.0
          %v356 = vsel %vm352, %v355, 0.0
          %vm357 = vcmask 7168
          %v358 = vsel %vm357, %v356, 0.0
          %359 = vadd.xlane.f32.xlu0 %v358
          %v360 = vpop.xlane.xlu0 %359
          %v361 = vrot.slane %v360, 4
          %v362 = vadd.f32 %v360, %v361
          %v363 = vrot.slane %v362, 2
          %v364 = vadd.f32 %v362, %v363
          %v365 = vrot.slane %v364, 1
          %v366 = vadd.f32 %v364, %v365
          %s367 = vtos %v366
          %v368 = vstv %s367
          %369 = vst [vmem:[%s219] sm:$0xff] %v368
        $region44: #{tpu_custom_call.1} parent=27 // pred_fallthru
          _
        %s370 = sand.u32 %s98, 1
        %s371 = scalar_lea.sflag [#allocation5], %s370
        %s372 = sand.u32 %s98, 1
        %s373 = smul.addr %s372, 8
        %s374 = scalar_lea.vmem [#allocation8], %s373
        // Predicated region
        $region45: #{tpu_custom_call.1} parent=27 // pred_check
          %p375 = pneg %p108
        $region46: #{tpu_custom_call.1} parent=27 // pred_check_branch
          %377 = sbr.rel (%p375) target = $region48
        $region47: #{tpu_custom_call.1} parent=27 // pred_region
          %s379 = ssub.s32 128, 128
          %380 = vsyncadd %s371, %s379
          %s381 = smul.addr %s26, 128
          %s382 = scalar_lea.hbm %s2, %s381
          %s384 = sshll.u32 %s374, 4
          %s385 = int_to_ptr.vmem [resolvable:$true] %s384
          %387 = dma.vmem_to_hbm [thread:$0]  %s385, 128, %s382, %s371
        $region48: #{tpu_custom_call.1} parent=27 // pred_fallthru
          _
      $region28: #{tpu_custom_call.1} parent=5 // pred_fallthru
        _
      %p388 = scmp.le.s32.totalorder 2, %s17
      // Predicated region
      $region49: #{tpu_custom_call.1} parent=5 // pred_check
        %p389 = pneg %p388
      $region50: #{tpu_custom_call.1} parent=5 // pred_check_branch
        %391 = sbr.rel (%p389) target = $region52
      $region51: #{tpu_custom_call.1} parent=5 // pred_region
        %s392 = ssub.s32 %s17, 2
        // Predicated region
        $region53: #{tpu_custom_call.1} parent=51 // pred_check
          %p393 = pneg %p114
        $region54: #{tpu_custom_call.1} parent=51 // pred_check_branch
          %395 = sbr.rel (%p393) target = $region56
        $region55: #{tpu_custom_call.1} parent=51 // pred_region
          %s396 = sand.u32 %s99, 1
          %s397 = scalar_lea.sflag [#allocation5], %s396
          %s398 = sand.u32 %s99, 1
          %s399 = smul.addr %s398, 8
          %s400 = scalar_lea.vmem [#allocation8], %s399
          %401 = dma.done %s397, 128
        $region56: #{tpu_custom_call.1} parent=51 // pred_fallthru
          _
      $region52: #{tpu_custom_call.1} parent=5 // pred_fallthru
        _
    $region6: #{tpu_custom_call.1} parent=1 // loop_footer
      %s21 = sadd.s32 1, %s17
    $region7: #{tpu_custom_call.1} parent=1 // loop_footer_branch
      %16 = sbr.rel target = $region3
    $region8: #{tpu_custom_call.1} parent=1 // loop_exit
      _
    %402 = vsyncpa [#allocation4], 1
    %s403 = scalar_lea.sflag [#allocation4], 1
    %404 = vsyncpa %s403, 1
    %405 = vsyncpa [#allocation7], 1
    %s406 = scalar_lea.sflag [#allocation7], 1
    %407 = vsyncpa %s406, 1
    %408 = vsyncpa [#allocation5], 1
    %s409 = scalar_lea.sflag [#allocation5], 1
    %410 = vsyncpa %s409, 1

</llo_original>
